<compile_context>
chip_gen: v6e
topology: v6e:2x2x1
jax: 0.10.0
libtpu: 0.0.40
codegen_flags: <defaults>
</compile_context>

<pallas_src>
import jax
import jax.numpy as jnp
from jax.experimental import pallas as pl
from jax.experimental.pallas import tpu as pltpu

_LANE = 128


def _round_up(n, m):
    return ((n + m - 1) // m) * m


def _make_kernel(num_layers, out_store):
    """Kernel fusing `num_layers` Linear layers (ReLU on all but the last)."""

    def kernel(*refs):
        x_ref = refs[0]
        o_ref = refs[-1]
        wb = refs[1:-1]

        h = x_ref[...]  # bf16 activations feed the MXU directly
        for li in range(num_layers):
            w_ref, b_ref = wb[2 * li], wb[2 * li + 1]
            # MXU matmul with f32 accumulation; bias add / ReLU stay in f32.
            acc = jnp.dot(h, w_ref[...], preferred_element_type=jnp.float32)
            acc = acc + b_ref[...]
            if li < num_layers - 1:
                acc = jnp.maximum(acc, 0.0)
                # Dropout is identity in eval mode.
                h = acc.astype(jnp.bfloat16)
            else:
                # Store only the real logit lanes (masked 8-lane vst is cheap
                # at this volume); keeps the (TB, 128) matmul for the MXU.
                o_ref[...] = acc[:, :out_store].astype(o_ref.dtype)

    return kernel


def prepare_params(params):
    """One-time layout prep (hoisted out of the forward path).

    params = ((w0, b0), (w1, b1), ...); w_i: (in, out) f32, b_i: (1, out) f32.
    Returns bf16 weights / f32 biases with every layer's output (lane) dim
    zero-padded to a multiple of 128 and K rows padded to the previous
    layer's padded width.
    """
    padded = []
    prev_dim = params[0][0].shape[0]  # x itself is not K-padded
    for (w, b) in params:
        k, n = w.shape
        n_pad = _round_up(n, _LANE)
        w_p = jnp.zeros((prev_dim, n_pad), jnp.bfloat16).at[:k, :n].set(
            w.astype(jnp.bfloat16))
        b_p = jnp.zeros((1, n_pad), jnp.float32).at[:, :n].set(
            b.astype(jnp.float32))
        padded.append((w_p, b_p))
        prev_dim = n_pad
    return tuple(padded)


def nn_bi_classifier_forward(x, padded_params, out_dim=2, *, batch_tile=8192):
    """x: (B, in_dim) f32; padded_params from prepare_params(); returns (B, out_dim) f32."""
    B, in_dim = x.shape
    num_layers = len(padded_params)
    out_store = max(8, _round_up(out_dim, 8))  # lanes actually written back

    x_bf16 = x.astype(jnp.bfloat16)

    # Batch tile: as large as reasonable (amortizes per-step overhead) but
    # never so large that the grid collapses to one step -- the "parallel"
    # axis needs >= 2 steps for v7x megacore to engage both TensorCores.
    TB = max(8, min(batch_tile, _round_up(pl.cdiv(B, 2), 8)))
    grid = (pl.cdiv(B, TB),)

    resident = pl.BlockSpec(memory_space=pltpu.MemorySpace.VMEM)
    in_specs = [pl.BlockSpec((TB, in_dim), lambda i: (i, 0))]  # streamed x
    flat_wb = []
    for (w_p, b_p) in padded_params:
        in_specs += [resident, resident]                       # VMEM-resident
        flat_wb += [w_p, b_p]

    out_specs = pl.BlockSpec((TB, out_store), lambda i: (i, 0))

    # VMEM budget: double-buffered x / logit tiles, resident weights, and
    # per-layer f32 (+ bf16 recast) intermediates, with ~2x headroom.
    inter = sum(TB * w_p.shape[1] * (4 + 2) for (w_p, _) in padded_params)
    per_step = (2 * TB * in_dim * 2            # x tiles (bf16, 2 buffers)
                + 2 * TB * out_store * 4       # logit tiles (f32, 2 buffers)
                + sum(w.size * 2 + b.size * 4 for w, b in padded_params)
                + inter)
    vmem_limit = int(min(48 * 1024 * 1024, max(2 * per_step, 16 * 1024 * 1024)))

    out8 = pl.pallas_call(
        _make_kernel(num_layers, out_store),
        out_shape=jax.ShapeDtypeStruct((B, out_store), jnp.float32),
        grid=grid,
        in_specs=in_specs,
        out_specs=out_specs,
        compiler_params=pltpu.CompilerParams(
            dimension_semantics=("parallel",),
            vmem_limit_bytes=vmem_limit),
    )(x_bf16, *flat_wb)

    return out8[:, :out_dim]


def init_params(key, input_dim, hidden_dims):
    """Deterministic init mimicking nn.Linear (uniform +-1/sqrt(fan_in))."""
    dims = [input_dim] + list(hidden_dims) + [2]
    params = []
    for i in range(len(dims) - 1):
        in_dim, out_dim = dims[i], dims[i + 1]
        key, kw, kb = jax.random.split(key, 3)
        bound = 1.0 / jnp.sqrt(in_dim)
        w = jax.random.uniform(kw, (in_dim, out_dim), jnp.float32, -bound, bound)
        b = jax.random.uniform(kb, (1, out_dim), jnp.float32, -bound, bound)
        params.append((w, b))
    return tuple(params)


def reference_forward(x, params):
    """Plain-JAX f32 reference of the PyTorch forward (eval mode)."""
    h = x
    for i, (w, b) in enumerate(params):
        h = h @ w + b
        if i < len(params) - 1:
            h = jnp.maximum(h, 0.0)
    return h


if __name__ == "__main__":
    input_dim = 32
    hidden_dims = [64, 32]
    batch = 8

    key = jax.random.PRNGKey(0)
    key, kx = jax.random.split(key)
    x = jax.random.normal(kx, (batch, input_dim), jnp.float32)
    params = init_params(key, input_dim, hidden_dims)

    padded = prepare_params(params)          # one-time layout prep
    fwd = jax.jit(nn_bi_classifier_forward)  # out_dim / batch_tile stay static
    out = jax.block_until_ready(fwd(x, padded))

    ref = reference_forward(x, params)
    assert out.shape == (batch, 2), out.shape
    # bf16 matmul inputs (f32 accumulation) => relaxed tolerance vs f32 ref.
    assert jnp.allclose(out, ref, atol=5e-2, rtol=5e-2), (
        f"max abs err {jnp.max(jnp.abs(out - ref))}")

    print("KERNEL_OK")
</pallas_src>

<mosaic_0001>
module attributes {stable_mosaic.version = 11 : i64} {
  func.func @kernel(%arg0: i32, %arg1: memref<8x32xbf16, #tpu.memory_space<vmem>>, %arg2: memref<32x128xbf16, #tpu.memory_space<vmem>>, %arg3: memref<1x128xf32, #tpu.memory_space<vmem>>, %arg4: memref<128x128xbf16, #tpu.memory_space<vmem>>, %arg5: memref<1x128xf32, #tpu.memory_space<vmem>>, %arg6: memref<128x128xbf16, #tpu.memory_space<vmem>>, %arg7: memref<1x128xf32, #tpu.memory_space<vmem>>, %arg8: memref<8x8xf32, #tpu.memory_space<vmem>>) attributes {dimension_semantics = [#tpu.dimension_semantics<parallel>], iteration_bounds = array<i64: 1>, scalar_prefetch = 0 : i64, scratch_operands = 0 : i64, tpu.core_type = #tpu.core_type<tc>, window_params = [{transform_indices = @transform_0, window_bounds = array<i64: 8, 32>}, {pipeline_mode = #tpu.pipeline_mode<synchronous>, transform_indices = @transform_1, window_bounds = array<i64: 32, 128>}, {pipeline_mode = #tpu.pipeline_mode<synchronous>, transform_indices = @transform_2, window_bounds = array<i64: 1, 128>}, {pipeline_mode = #tpu.pipeline_mode<synchronous>, transform_indices = @transform_3, window_bounds = array<i64: 128, 128>}, {pipeline_mode = #tpu.pipeline_mode<synchronous>, transform_indices = @transform_4, window_bounds = array<i64: 1, 128>}, {pipeline_mode = #tpu.pipeline_mode<synchronous>, transform_indices = @transform_5, window_bounds = array<i64: 128, 128>}, {pipeline_mode = #tpu.pipeline_mode<synchronous>, transform_indices = @transform_6, window_bounds = array<i64: 1, 128>}, {transform_indices = @transform_7, window_bounds = array<i64: 8, 8>}]} {
    %c0 = arith.constant 0 : index
    %c0_0 = arith.constant 0 : index
    %0 = vector.load %arg1[%c0, %c0_0] : memref<8x32xbf16, #tpu.memory_space<vmem>>, vector<8x32xbf16>
    %c0_1 = arith.constant 0 : index
    %c0_2 = arith.constant 0 : index
    %1 = vector.load %arg2[%c0_1, %c0_2] : memref<32x128xbf16, #tpu.memory_space<vmem>>, vector<32x128xbf16>
    %cst = arith.constant dense<0.000000e+00> : vector<8x128xf32>
    %2 = tpu.matmul %0, %1, %cst {dimension_numbers = #tpu.dot_dimension_numbers<[1], [0], [0], [1], [0, 0, 1, 1], [], []>} : vector<8x32xbf16>, vector<32x128xbf16>, vector<8x128xf32> -> vector<8x128xf32>
    %c0_3 = arith.constant 0 : index
    %c0_4 = arith.constant 0 : index
    %3 = vector.load %arg3[%c0_3, %c0_4] : memref<1x128xf32, #tpu.memory_space<vmem>>, vector<1x128xf32>
    %4 = vector.broadcast %3 : vector<1x128xf32> to vector<8x128xf32>
    %5 = arith.addf %2, %4 : vector<8x128xf32>
    %cst_5 = arith.constant 0.000000e+00 : f32
    %6 = vector.broadcast %cst_5 : f32 to vector<8x128xf32>
    %7 = arith.maximumf %5, %6 : vector<8x128xf32>
    %8 = arith.truncf %7 : vector<8x128xf32> to vector<8x128xbf16>
    %c0_6 = arith.constant 0 : index
    %c0_7 = arith.constant 0 : index
    %9 = vector.load %arg4[%c0_6, %c0_7] : memref<128x128xbf16, #tpu.memory_space<vmem>>, vector<128x128xbf16>
    %cst_8 = arith.constant dense<0.000000e+00> : vector<8x128xf32>
    %10 = tpu.matmul %8, %9, %cst_8 {dimension_numbers = #tpu.dot_dimension_numbers<[1], [0], [0], [1], [0, 0, 1, 1], [], []>} : vector<8x128xbf16>, vector<128x128xbf16>, vector<8x128xf32> -> vector<8x128xf32>
    %c0_9 = arith.constant 0 : index
    %c0_10 = arith.constant 0 : index
    %11 = vector.load %arg5[%c0_9, %c0_10] : memref<1x128xf32, #tpu.memory_space<vmem>>, vector<1x128xf32>
    %12 = vector.broadcast %11 : vector<1x128xf32> to vector<8x128xf32>
    %13 = arith.addf %10, %12 : vector<8x128xf32>
    %cst_11 = arith.constant 0.000000e+00 : f32
    %14 = vector.broadcast %cst_11 : f32 to vector<8x128xf32>
    %15 = arith.maximumf %13, %14 : vector<8x128xf32>
    %16 = arith.truncf %15 : vector<8x128xf32> to vector<8x128xbf16>
    %c0_12 = arith.constant 0 : index
    %c0_13 = arith.constant 0 : index
    %17 = vector.load %arg6[%c0_12, %c0_13] : memref<128x128xbf16, #tpu.memory_space<vmem>>, vector<128x128xbf16>
    %cst_14 = arith.constant dense<0.000000e+00> : vector<8x128xf32>
    %18 = tpu.matmul %16, %17, %cst_14 {dimension_numbers = #tpu.dot_dimension_numbers<[1], [0], [0], [1], [0, 0, 1, 1], [], []>} : vector<8x128xbf16>, vector<128x128xbf16>, vector<8x128xf32> -> vector<8x128xf32>
    %c0_15 = arith.constant 0 : index
    %c0_16 = arith.constant 0 : index
    %19 = vector.load %arg7[%c0_15, %c0_16] : memref<1x128xf32, #tpu.memory_space<vmem>>, vector<1x128xf32>
    %20 = vector.broadcast %19 : vector<1x128xf32> to vector<8x128xf32>
    %21 = arith.addf %18, %20 : vector<8x128xf32>
    %22 = vector.extract_strided_slice %21 {offsets = [0, 0], sizes = [8, 8], strides = [1, 1]} : vector<8x128xf32> to vector<8x8xf32>
    %c0_17 = arith.constant 0 : index
    %c0_18 = arith.constant 0 : index
    %23 = vector.load %arg8[%c0_17, %c0_18] : memref<8x8xf32, #tpu.memory_space<vmem>>, vector<8x8xf32>
    tpu.vector_store %arg8[%c0_17, %c0_18], %22 {strides = array<i32>} : memref<8x8xf32, #tpu.memory_space<vmem>>, vector<8x8xf32>,
    return
  }
  func.func @transform_0(%arg0: i32) -> (i32, i32) {
    %c0_i32 = arith.constant 0 : i32
    %c0_i32_0 = arith.constant 0 : i32
    return %arg0, %c0_i32 : i32, i32
  }
  func.func @transform_1(%arg0: i32) -> (i32, i32) {
    %c0_i32 = arith.constant 0 : i32
    %c0_i32_0 = arith.constant 0 : i32
    %c0_i32_1 = arith.constant 0 : i32
    return %c0_i32, %c0_i32_0 : i32, i32
  }
  func.func @transform_2(%arg0: i32) -> (i32, i32) {
    %c0_i32 = arith.constant 0 : i32
    %c0_i32_0 = arith.constant 0 : i32
    %c0_i32_1 = arith.constant 0 : i32
    return %c0_i32, %c0_i32_0 : i32, i32
  }
  func.func @transform_3(%arg0: i32) -> (i32, i32) {
    %c0_i32 = arith.constant 0 : i32
    %c0_i32_0 = arith.constant 0 : i32
    %c0_i32_1 = arith.constant 0 : i32
    return %c0_i32, %c0_i32_0 : i32, i32
  }
  func.func @transform_4(%arg0: i32) -> (i32, i32) {
    %c0_i32 = arith.constant 0 : i32
    %c0_i32_0 = arith.constant 0 : i32
    %c0_i32_1 = arith.constant 0 : i32
    return %c0_i32, %c0_i32_0 : i32, i32
  }
  func.func @transform_5(%arg0: i32) -> (i32, i32) {
    %c0_i32 = arith.constant 0 : i32
    %c0_i32_0 = arith.constant 0 : i32
    %c0_i32_1 = arith.constant 0 : i32
    return %c0_i32, %c0_i32_0 : i32, i32
  }
  func.func @transform_6(%arg0: i32) -> (i32, i32) {
    %c0_i32 = arith.constant 0 : i32
    %c0_i32_0 = arith.constant 0 : i32
    %c0_i32_1 = arith.constant 0 : i32
    return %c0_i32, %c0_i32_0 : i32, i32
  }
  func.func @transform_7(%arg0: i32) -> (i32, i32) {
    %c0_i32 = arith.constant 0 : i32
    %c0_i32_0 = arith.constant 0 : i32
    return %arg0, %c0_i32 : i32, i32
  }
}

</mosaic_0001>

<llo_original>
// kernel: nn_bi_classifier_forward.1
$region0: #{nn_bi_classifier_forward.1}
  #allocation0 [shape = 'u32[]', space=smem, size = 0x4, offset = 0x4, fixed_abs, tag = 'smem constant byte address 0x4 - core index']
  #allocation1 [shape = 'u32[144,128]{1,0:T(1,128)}', space=vmem, size = 0x12000, scoped, tag = 'internal scratch']
  %s0 = inlined_call_operand.vmem [shape: bf16[8,32], index: 0, kind: input, shape index: {}]
  %s1 = inlined_call_operand.hbm [shape: bf16[32,128], index: 1, kind: input, shape index: {}]
  %s2 = inlined_call_operand.vmem [shape: f32[1,128], index: 2, kind: input, shape index: {}]
  %s3 = inlined_call_operand.hbm [shape: bf16[128,128], index: 3, kind: input, shape index: {}]
  %s4 = inlined_call_operand.vmem [shape: f32[1,128], index: 4, kind: input, shape index: {}]
  %s5 = inlined_call_operand.hbm [shape: bf16[128,128], index: 5, kind: input, shape index: {}]
  %s6 = inlined_call_operand.vmem [shape: f32[1,128], index: 6, kind: input, shape index: {}]
  %s7 = inlined_call_operand.vmem [shape: f32[8,8], index: 7, kind: output, shape index: {}]
  %s8 = sld [smem:[#allocation0]]
  $region50: #{nn_bi_classifier_forward.1} parent=0
    _
  %s10 = ssub.s32 1, %s8
  %s11 = scalar_select 0, %s10, %s8
  $region1: #{nn_bi_classifier_forward.1} parent=0
    #allocation2 [shape = 'u8[8192]{0}', space=vmem, size = 0x2000, scoped, tag = 'input window, operand 1, single buffered']
    #allocation3 [shape = 's32[1]{0}', space=sflag, size = 0x4, scoped, tag = 'scoped memory for nn_bi_classifier_forward.1']
    #allocation4 [shape = 'u8[32768]{0}', space=vmem, size = 0x8000, scoped, tag = 'input window, operand 3, single buffered']
    #allocation5 [shape = 's32[1]{0}', space=sflag, size = 0x4, scoped, tag = 'scoped memory for nn_bi_classifier_forward.1']
    #allocation6 [shape = 'u8[32768]{0}', space=vmem, size = 0x8000, scoped, tag = 'input window, operand 5, single buffered']
    %12 = vsyncpa [#allocation3], 0
    %13 = vsyncpa [#allocation5], 0
    // Predicated region
    $region2: #{nn_bi_classifier_forward.1} parent=1 // pred_check
      _
    $region3: #{nn_bi_classifier_forward.1} parent=1 // pred_check_branch
      %15 = sbr.rel (0) target = $region5
    $region4: #{nn_bi_classifier_forward.1} parent=1 // pred_region
      _
    $region5: #{nn_bi_classifier_forward.1} parent=1 // pred_fallthru
      _
    // Predicated region
    $region6: #{nn_bi_classifier_forward.1} parent=1 // pred_check
      _
    $region7: #{nn_bi_classifier_forward.1} parent=1 // pred_check_branch
      %17 = sbr.rel (0) target = $region9
    $region8: #{nn_bi_classifier_forward.1} parent=1 // pred_region
      %s19 = ssub.s32 256, 256
      %20 = vsyncadd [#allocation3], %s19
      %s21 = sshll.u32 [#allocation2], 4
      %s22 = int_to_ptr.vmem [resolvable:$true] %s21
      %27 = dma.hbm_to_vmem [thread:$0]  %s1, 256, %s22, [#allocation3], 64, 64, 4
    $region9: #{nn_bi_classifier_forward.1} parent=1 // pred_fallthru
      _
    // Predicated region
    $region10: #{nn_bi_classifier_forward.1} parent=1 // pred_check
      _
    $region11: #{nn_bi_classifier_forward.1} parent=1 // pred_check_branch
      %29 = sbr.rel (0) target = $region13
    $region12: #{nn_bi_classifier_forward.1} parent=1 // pred_region
      _
    $region13: #{nn_bi_classifier_forward.1} parent=1 // pred_fallthru
      _
    // Predicated region
    $region14: #{nn_bi_classifier_forward.1} parent=1 // pred_check
      _
    $region15: #{nn_bi_classifier_forward.1} parent=1 // pred_check_branch
      %31 = sbr.rel (0) target = $region17
    $region16: #{nn_bi_classifier_forward.1} parent=1 // pred_region
      %s33 = ssub.s32 1024, 1024
      %34 = vsyncadd [#allocation5], %s33
      %s35 = sshll.u32 [#allocation4], 4
      %s36 = int_to_ptr.vmem [resolvable:$true] %s35
      %41 = dma.hbm_to_vmem [thread:$0]  %s3, 1024, %s36, [#allocation5], 64, 64, 4
    $region17: #{nn_bi_classifier_forward.1} parent=1 // pred_fallthru
      _
    // Predicated region
    $region18: #{nn_bi_classifier_forward.1} parent=1 // pred_check
      _
    $region19: #{nn_bi_classifier_forward.1} parent=1 // pred_check_branch
      %43 = sbr.rel (0) target = $region21
    $region20: #{nn_bi_classifier_forward.1} parent=1 // pred_region
      _
    $region21: #{nn_bi_classifier_forward.1} parent=1 // pred_fallthru
      _
    // Predicated region
    $region22: #{nn_bi_classifier_forward.1} parent=1 // pred_check
      _
    $region23: #{nn_bi_classifier_forward.1} parent=1 // pred_check_branch
      %45 = sbr.rel (0) target = $region25
    $region24: #{nn_bi_classifier_forward.1} parent=1 // pred_region
      %s47 = ssub.s32 1024, 1024
      %48 = vsyncadd [#allocation5], %s47
      %s49 = sshll.u32 [#allocation6], 4
      %s50 = int_to_ptr.vmem [resolvable:$true] %s49
      %55 = dma.hbm_to_vmem [thread:$0]  %s5, 1024, %s50, [#allocation5], 64, 64, 4
    $region25: #{nn_bi_classifier_forward.1} parent=1 // pred_fallthru
      _
    // Predicated region
    $region26: #{nn_bi_classifier_forward.1} parent=1 // pred_check
      _
    $region27: #{nn_bi_classifier_forward.1} parent=1 // pred_check_branch
      %57 = sbr.rel (0) target = $region29
    $region28: #{nn_bi_classifier_forward.1} parent=1 // pred_region
      _
    $region29: #{nn_bi_classifier_forward.1} parent=1 // pred_fallthru
      _
    // Predicated region
    $region30: #{nn_bi_classifier_forward.1} parent=1 // pred_check
      _
    $region31: #{nn_bi_classifier_forward.1} parent=1 // pred_check_branch
      %59 = sbr.rel (0) target = $region33
    $region32: #{nn_bi_classifier_forward.1} parent=1 // pred_region
      %60 = dma.done [#allocation3], 256
    $region33: #{nn_bi_classifier_forward.1} parent=1 // pred_fallthru
      _
    // Predicated region
    $region34: #{nn_bi_classifier_forward.1} parent=1 // pred_check
      _
    $region35: #{nn_bi_classifier_forward.1} parent=1 // pred_check_branch
      %62 = sbr.rel (0) target = $region37
    $region36: #{nn_bi_classifier_forward.1} parent=1 // pred_region
      %63 = dma.done [#allocation5], 1024
    $region37: #{nn_bi_classifier_forward.1} parent=1 // pred_fallthru
      _
    // Predicated region
    $region38: #{nn_bi_classifier_forward.1} parent=1 // pred_check
      _
    $region39: #{nn_bi_classifier_forward.1} parent=1 // pred_check_branch
      %65 = sbr.rel (0) target = $region41
    $region40: #{nn_bi_classifier_forward.1} parent=1 // pred_region
      %66 = dma.done [#allocation5], 1024
    $region41: #{nn_bi_classifier_forward.1} parent=1 // pred_fallthru
      _
    %v68 = vld [vmem:[%s0] sm:$0xf]
    %v69 = vld [vmem:[#allocation2] sm:$0xf]
    %v70 = vld [vmem:[#allocation2 + $0x4] sm:$0xf]
    %v71 = vld [vmem:[#allocation2 + $0x8] sm:$0xf]
    %v72 = vld [vmem:[#allocation2 + $0xc] sm:$0xf]
    %v73 = vld [vmem:[%s2] sm:$0x1]
    %v75 = vlaneseq
    %v76 = vshrl.u32 %v75, 7
    %v77 = vsub.s32 0, %v76
    %v78 = vrot.slane %v73, %v77
    %v84 = vunpack.c.l.b16 %v69
    %v85 = vunpack.c.l.b16 %v70
    %v86 = vunpack.c.l.b16 %v71
    %v87 = vunpack.c.l.b16 %v72
    %v88 = vpack.c.b16 %v85, %v84
    %v89 = vpack.c.b16 %v87, %v86
    %vm92 = vcmask 261120
    %v94 = vsel %vm92, %v68, 0
    %96 = vmatprep.subr.bf16.mxu0 0
    %97 = vmatpush1.bf16.msra.mxu0 0
    %98 = vmatprep.subr.bf16.mxu0 0
    %99 = vmatpush1.bf16.msra.mxu0 0
    %100 = vmatprep.subr.bf16.mxu0 0
    %101 = vmatpush1.bf16.msra.mxu0 0
    %102 = vmatprep.subr.bf16.mxu0 0
    %103 = vmatpush1.bf16.msra.mxu0 0
    %104 = vmatprep.subr.bf16.mxu0 0
    %105 = vmatpush1.bf16.msra.mxu0 0
    %106 = vmatprep.subr.bf16.mxu0 0
    %107 = vmatpush1.bf16.msra.mxu0 0
    %108 = vmatprep.subr.bf16.mxu0 0
    %109 = vmatpush1.bf16.msra.mxu0 %v89
    %110 = vmatprep.subr.bf16.mxu0 0
    %111 = vmatpush1.bf16.msra.mxu0 %v88
    %112 = vmatprep.subr.bf16.mxu0 0
    %113 = vmatpush2.bf16.msra.mxu0 0
    %114 = vmatprep.subr.bf16.mxu0 0
    %115 = vmatpush2.bf16.msra.mxu0 0
    %116 = vmatprep.subr.bf16.mxu0 0
    %117 = vmatpush2.bf16.msra.mxu0 0
    %118 = vmatprep.subr.bf16.mxu0 0
    %119 = vmatpush2.bf16.msra.mxu0 0
    %120 = vmatprep.subr.bf16.mxu0 0
    %121 = vmatpush2.bf16.msra.mxu0 0
    %122 = vmatprep.subr.bf16.mxu0 0
    %123 = vmatpush2.bf16.msra.mxu0 0
    %124 = vmatprep.subr.bf16.mxu0 0
    %125 = vmatpush2.bf16.msra.mxu0 0
    %126 = vmatprep.subr.bf16.mxu0 0
    %127 = vmatpush2.bf16.msra.mxu0 0
    %128 = vmatprep.mubr.bf16.mxu0 0
    %129 = vmatmul.mubr.bf16.gmra.mxu0 %v94
    %v130 = vpop.f32.mrf.mxu0
    %v131 = vadd.f32 %v78, %v130
    %v132 = vpop.f32.mrf.mxu0
    %v133 = vpop.f32.mrf.mxu0
    %v134 = vpop.f32.mrf.mxu0
    %135 = vdwg.mxu0
    %v136 = vmax.f32 %v131, 0.0
    %v137 = vpack.c.bf16 %v136, %v136
    %v138 = vld [vmem:[#allocation4] sm:$0xf]
    %v139 = vld [vmem:[#allocation4 + $0x4] sm:$0xf]
    %v140 = vld [vmem:[#allocation4 + $0x8] sm:$0xf]
    %v141 = vld [vmem:[#allocation4 + $0xc] sm:$0xf]
    %v142 = vld [vmem:[#allocation4 + $0x10] sm:$0xf]
    %v143 = vld [vmem:[#allocation4 + $0x14] sm:$0xf]
    %v144 = vld [vmem:[#allocation4 + $0x18] sm:$0xf]
    %v145 = vld [vmem:[#allocation4 + $0x1c] sm:$0xf]
    %v146 = vld [vmem:[#allocation4 + $0x20] sm:$0xf]
    %v147 = vld [vmem:[#allocation4 + $0x24] sm:$0xf]
    %v148 = vld [vmem:[#allocation4 + $0x28] sm:$0xf]
    %v149 = vld [vmem:[#allocation4 + $0x2c] sm:$0xf]
    %v150 = vld [vmem:[#allocation4 + $0x30] sm:$0xf]
    %v151 = vld [vmem:[#allocation4 + $0x34] sm:$0xf]
    %v152 = vld [vmem:[#allocation4 + $0x38] sm:$0xf]
    %v153 = vld [vmem:[#allocation4 + $0x3c] sm:$0xf]
    %v154 = vld [vmem:[%s4] sm:$0x1]
    %v156 = vlaneseq
    %v157 = vshrl.u32 %v156, 7
    %v158 = vsub.s32 0, %v157
    %v159 = vrot.slane %v154, %v158
    %v177 = vunpack.c.l.b16 %v138
    %v178 = vunpack.c.l.b16 %v139
    %v179 = vunpack.c.l.b16 %v140
    %v180 = vunpack.c.l.b16 %v141
    %v181 = vunpack.c.l.b16 %v142
    %v182 = vunpack.c.l.b16 %v143
    %v183 = vunpack.c.l.b16 %v144
    %v184 = vunpack.c.l.b16 %v145
    %v185 = vunpack.c.l.b16 %v146
    %v186 = vunpack.c.l.b16 %v147
    %v187 = vunpack.c.l.b16 %v148
    %v188 = vunpack.c.l.b16 %v149
    %v189 = vunpack.c.l.b16 %v150
    %v190 = vunpack.c.l.b16 %v151
    %v191 = vunpack.c.l.b16 %v152
    %v192 = vunpack.c.l.b16 %v153
    %v193 = vpack.c.b16 %v178, %v177
    %v194 = vpack.c.b16 %v180, %v179
    %v195 = vpack.c.b16 %v182, %v181
    %v196 = vpack.c.b16 %v184, %v183
    %v197 = vpack.c.b16 %v186, %v185
    %v198 = vpack.c.b16 %v188, %v187
    %v199 = vpack.c.b16 %v190, %v189
    %v200 = vpack.c.b16 %v192, %v191
    %209 = vmatprep.subr.bf16.mxu0 0
    %210 = vmatpush1.bf16.msra.mxu0 %v200
    %211 = vmatprep.subr.bf16.mxu0 0
    %212 = vmatpush1.bf16.msra.mxu0 %v199
    %213 = vmatprep.subr.bf16.mxu0 0
    %214 = vmatpush1.bf16.msra.mxu0 %v198
    %215 = vmatprep.subr.bf16.mxu0 0
    %216 = vmatpush1.bf16.msra.mxu0 %v197
    %217 = vmatprep.subr.bf16.mxu0 0
    %218 = vmatpush1.bf16.msra.mxu0 %v196
    %219 = vmatprep.subr.bf16.mxu0 0
    %220 = vmatpush1.bf16.msra.mxu0 %v195
    %221 = vmatprep.subr.bf16.mxu0 0
    %222 = vmatpush1.bf16.msra.mxu0 %v194
    %223 = vmatprep.subr.bf16.mxu0 0
    %224 = vmatpush1.bf16.msra.mxu0 %v193
    %225 = vmatprep.subr.bf16.mxu0 0
    %226 = vmatpush2.bf16.msra.mxu0 0
    %227 = vmatprep.subr.bf16.mxu0 0
    %228 = vmatpush2.bf16.msra.mxu0 0
    %229 = vmatprep.subr.bf16.mxu0 0
    %230 = vmatpush2.bf16.msra.mxu0 0
    %231 = vmatprep.subr.bf16.mxu0 0
    %232 = vmatpush2.bf16.msra.mxu0 0
    %233 = vmatprep.subr.bf16.mxu0 0
    %234 = vmatpush2.bf16.msra.mxu0 0
    %235 = vmatprep.subr.bf16.mxu0 0
    %236 = vmatpush2.bf16.msra.mxu0 0
    %237 = vmatprep.subr.bf16.mxu0 0
    %238 = vmatpush2.bf16.msra.mxu0 0
    %239 = vmatprep.subr.bf16.mxu0 0
    %240 = vmatpush2.bf16.msra.mxu0 0
    %241 = vmatprep.mubr.bf16.mxu0 0
    %242 = vmatmul.mubr.bf16.gmra.mxu0 %v137
    %v243 = vpop.f32.mrf.mxu0
    %v244 = vadd.f32 %v159, %v243
    %v245 = vpop.f32.mrf.mxu0
    %v246 = vpop.f32.mrf.mxu0
    %v247 = vpop.f32.mrf.mxu0
    %248 = vdwg.mxu0
    %v249 = vmax.f32 %v244, 0.0
    %v250 = vpack.c.bf16 %v249, %v249
    %v251 = vld [vmem:[#allocation6] sm:$0xf]
    %v252 = vld [vmem:[#allocation6 + $0x4] sm:$0xf]
    %v253 = vld [vmem:[#allocation6 + $0x8] sm:$0xf]
    %v254 = vld [vmem:[#allocation6 + $0xc] sm:$0xf]
    %v255 = vld [vmem:[#allocation6 + $0x10] sm:$0xf]
    %v256 = vld [vmem:[#allocation6 + $0x14] sm:$0xf]
    %v257 = vld [vmem:[#allocation6 + $0x18] sm:$0xf]
    %v258 = vld [vmem:[#allocation6 + $0x1c] sm:$0xf]
    %v259 = vld [vmem:[#allocation6 + $0x20] sm:$0xf]
    %v260 = vld [vmem:[#allocation6 + $0x24] sm:$0xf]
    %v261 = vld [vmem:[#allocation6 + $0x28] sm:$0xf]
    %v262 = vld [vmem:[#allocation6 + $0x2c] sm:$0xf]
    %v263 = vld [vmem:[#allocation6 + $0x30] sm:$0xf]
    %v264 = vld [vmem:[#allocation6 + $0x34] sm:$0xf]
    %v265 = vld [vmem:[#allocation6 + $0x38] sm:$0xf]
    %v266 = vld [vmem:[#allocation6 + $0x3c] sm:$0xf]
    %v267 = vld [vmem:[%s6] sm:$0x1]
    %v269 = vlaneseq
    %v270 = vshrl.u32 %v269, 7
    %v271 = vsub.s32 0, %v270
    %v272 = vrot.slane %v267, %v271
    %v290 = vunpack.c.l.b16 %v251
    %v291 = vunpack.c.l.b16 %v252
    %v292 = vunpack.c.l.b16 %v253
    %v293 = vunpack.c.l.b16 %v254
    %v294 = vunpack.c.l.b16 %v255
    %v295 = vunpack.c.l.b16 %v256
    %v296 = vunpack.c.l.b16 %v257
    %v297 = vunpack.c.l.b16 %v258
    %v298 = vunpack.c.l.b16 %v259
    %v299 = vunpack.c.l.b16 %v260
    %v300 = vunpack.c.l.b16 %v261
    %v301 = vunpack.c.l.b16 %v262
    %v302 = vunpack.c.l.b16 %v263
    %v303 = vunpack.c.l.b16 %v264
    %v304 = vunpack.c.l.b16 %v265
    %v305 = vunpack.c.l.b16 %v266
    %v306 = vpack.c.b16 %v291, %v290
    %v307 = vpack.c.b16 %v293, %v292
    %v308 = vpack.c.b16 %v295, %v294
    %v309 = vpack.c.b16 %v297, %v296
    %v310 = vpack.c.b16 %v299, %v298
    %v311 = vpack.c.b16 %v301, %v300
    %v312 = vpack.c.b16 %v303, %v302
    %v313 = vpack.c.b16 %v305, %v304
    %322 = vmatprep.subr.bf16.mxu0 0
    %323 = vmatpush1.bf16.msra.mxu0 %v313
    %324 = vmatprep.subr.bf16.mxu0 0
    %325 = vmatpush1.bf16.msra.mxu0 %v312
    %326 = vmatprep.subr.bf16.mxu0 0
    %327 = vmatpush1.bf16.msra.mxu0 %v311
    %328 = vmatprep.subr.bf16.mxu0 0
    %329 = vmatpush1.bf16.msra.mxu0 %v310
    %330 = vmatprep.subr.bf16.mxu0 0
    %331 = vmatpush1.bf16.msra.mxu0 %v309
    %332 = vmatprep.subr.bf16.mxu0 0
    %333 = vmatpush1.bf16.msra.mxu0 %v308
    %334 = vmatprep.subr.bf16.mxu0 0
    %335 = vmatpush1.bf16.msra.mxu0 %v307
    %336 = vmatprep.subr.bf16.mxu0 0
    %337 = vmatpush1.bf16.msra.mxu0 %v306
    %338 = vmatprep.subr.bf16.mxu0 0
    %339 = vmatpush2.bf16.msra.mxu0 0
    %340 = vmatprep.subr.bf16.mxu0 0
    %341 = vmatpush2.bf16.msra.mxu0 0
    %342 = vmatprep.subr.bf16.mxu0 0
    %343 = vmatpush2.bf16.msra.mxu0 0
    %344 = vmatprep.subr.bf16.mxu0 0
    %345 = vmatpush2.bf16.msra.mxu0 0
    %346 = vmatprep.subr.bf16.mxu0 0
    %347 = vmatpush2.bf16.msra.mxu0 0
    %348 = vmatprep.subr.bf16.mxu0 0
    %349 = vmatpush2.bf16.msra.mxu0 0
    %350 = vmatprep.subr.bf16.mxu0 0
    %351 = vmatpush2.bf16.msra.mxu0 0
    %352 = vmatprep.subr.bf16.mxu0 0
    %353 = vmatpush2.bf16.msra.mxu0 0
    %354 = vmatprep.mubr.bf16.mxu0 0
    %355 = vmatmul.mubr.bf16.gmra.mxu0 %v250
    %v356 = vpop.f32.mrf.mxu0
    %v357 = vadd.f32 %v272, %v356
    %v358 = vpop.f32.mrf.mxu0
    %v359 = vpop.f32.mrf.mxu0
    %v360 = vpop.f32.mrf.mxu0
    %361 = vdwg.mxu0
    %vm362 = vcmask 64512
    %363 = vst.msk [vmem:[%s7] sm:$0xff] %vm362, %v357
    // Predicated region
    $region42: #{nn_bi_classifier_forward.1} parent=1 // pred_check
      _
    $region43: #{nn_bi_classifier_forward.1} parent=1 // pred_check_branch
      %365 = sbr.rel (0) target = $region45
    $region44: #{nn_bi_classifier_forward.1} parent=1 // pred_region
      _
    $region45: #{nn_bi_classifier_forward.1} parent=1 // pred_fallthru
      _
    // Predicated region
    $region46: #{nn_bi_classifier_forward.1} parent=1 // pred_check
      _
    $region47: #{nn_bi_classifier_forward.1} parent=1 // pred_check_branch
      %367 = sbr.rel (0) target = $region49
    $region48: #{nn_bi_classifier_forward.1} parent=1 // pred_region
      _
    $region49: #{nn_bi_classifier_forward.1} parent=1 // pred_fallthru
      _
    %368 = vsyncpa [#allocation3], 1
    %369 = vsyncpa [#allocation5], 1

</llo_original>
